<compile_context>
chip_gen: v6e
topology: v6e:2x2x1
jax: 0.10.0
libtpu: 0.0.40
codegen_flags: <defaults>
</compile_context>

<pallas_src>
import math

import jax
import jax.numpy as jnp
import numpy as np
from jax import lax
from jax.experimental import pallas as pl
from jax.experimental.pallas import tpu as pltpu

_VMEM_LIMIT = 32 * 1024 * 1024  # safe on v5e/v6e/v7x; tiles use <8 MiB double-buffered


# ---------------------------------------------------------------------------
# Helpers
# ---------------------------------------------------------------------------
def _round_up(a, b):
    return (a + b - 1) // b * b


def _pad2(a, rows, cols):
    r, c = a.shape
    if r == rows and c == cols:
        return a
    return jnp.pad(a, ((0, rows - r), (0, cols - c)))


def _pick_kc_tiles(D, C, max_tk):
    """Tiles for the reduction (D) and output-lane (C) dimensions."""
    tk = min(_round_up(max_tk, 128), _round_up(D, 128))
    c_lanes = _round_up(C, 128) // 128
    tn_lanes = min(4, c_lanes)  # tn <= 512
    # v7x has 2 TensorCores: keep >=2 blocks along the parallel C axis when possible.
    if c_lanes >= 2 and c_lanes // tn_lanes < 2:
        tn_lanes = (c_lanes + 1) // 2
    return tk, 128 * tn_lanes


def _pick_tm(B):
    # Multiple of 16 (bf16 sublane packing); capped so double-buffered tiles stay small.
    return min(256, _round_up(max(B, 1), 16))


def prepare_weight(w, *, mxu_dtype=jnp.bfloat16, max_tk=2048):
    """Pad the (D, C) weight to tile multiples and cast to the MXU dtype ONCE.

    Do this at parameter-init time and pass the result as `prepared=` to the
    forward functions, so the weight is not re-padded/re-cast every call.
    """
    D, C = w.shape
    tk, tn = _pick_kc_tiles(D, C, max_tk)
    Dp, Cp = _round_up(D, tk), _round_up(C, tn)
    wp = _pad2(w, Dp, Cp).astype(mxu_dtype)
    return wp, (D, C, tk, tn)


# ---------------------------------------------------------------------------
# Kernels
# ---------------------------------------------------------------------------
def _lsx_train_kernel(x_ref, w_ref, tgt_ref, bl_ref, out_ref):
    """Collapsed-k path: single matmul + masked large-margin epilogue (no scratch)."""
    j = pl.program_id(1)
    acc = jnp.dot(x_ref[...], w_ref[...], preferred_element_type=jnp.float32)
    tm, tn = acc.shape
    col = lax.broadcasted_iota(jnp.int32, (tm, tn), 1) + j * tn
    out_ref[...] = jnp.where(col == tgt_ref[...], bl_ref[...], acc).astype(out_ref.dtype)


def _lsx_train_kernel_acc(x_ref, w_ref, tgt_ref, bl_ref, out_ref, acc_ref):
    """k-tiled path for large D: f32 VMEM accumulator, pl.when init/epilogue."""
    # NOTE: program_id / num_programs are read OUTSIDE the pl.when bodies on purpose
    # (binding them inside the cond branch does not lower).
    j = pl.program_id(1)
    kk = pl.program_id(2)
    nk = pl.num_programs(2)

    @pl.when(kk == 0)
    def _():
        acc_ref[...] = jnp.zeros_like(acc_ref)

    acc_ref[...] += jnp.dot(x_ref[...], w_ref[...],
                            preferred_element_type=jnp.float32)

    @pl.when(kk == nk - 1)
    def _():
        acc = acc_ref[...]
        tm, tn = acc.shape
        col = lax.broadcasted_iota(jnp.int32, (tm, tn), 1) + j * tn
        out_ref[...] = jnp.where(col == tgt_ref[...], bl_ref[...], acc
                                 ).astype(out_ref.dtype)


def _matmul_kernel(x_ref, w_ref, out_ref):
    """Collapsed-k eval matmul."""
    out_ref[...] = jnp.dot(x_ref[...], w_ref[...],
                           preferred_element_type=jnp.float32).astype(out_ref.dtype)


def _matmul_kernel_acc(x_ref, w_ref, out_ref, acc_ref):
    """k-tiled eval matmul."""
    kk = pl.program_id(2)
    nk = pl.num_programs(2)

    @pl.when(kk == 0)
    def _():
        acc_ref[...] = jnp.zeros_like(acc_ref)

    acc_ref[...] += jnp.dot(x_ref[...], w_ref[...],
                            preferred_element_type=jnp.float32)

    @pl.when(kk == nk - 1)
    def _():
        out_ref[...] = acc_ref[...].astype(out_ref.dtype)


# ---------------------------------------------------------------------------
# Wrappers
# ---------------------------------------------------------------------------
def lsoftmax_forward_train(x, w, target, *, margin, it=0, beta_min=2.0,
                           beta_max=300.0, prepared=None,
                           mxu_dtype=jnp.bfloat16, max_tk=2048):
    """Training-mode LSoftmaxLinear forward (target required)."""
    B, D = x.shape
    if prepared is None:
        # In production, call prepare_weight() once at init instead.
        prepared = prepare_weight(w, mxu_dtype=mxu_dtype, max_tk=max_tk)
    wp, (Dw, C, tk, tn) = prepared
    assert D == Dw and w.shape == (D, C)
    beta = max(beta_min, beta_max / (1.0 + 0.01 * it))

    # ---- hoisted per-row margin math: O(B*D), tiny next to the O(B*D*C) matmul ----
    # Gather only the B target columns of w (no full w.T / full f32 upcast).
    xf = x.astype(jnp.float32)
    wt = jnp.take(w, target, axis=1).astype(jnp.float32)          # (D, B)
    logit_target = jnp.einsum('bd,db->b', xf, wt)                 # (B,)
    x_norm = jnp.sqrt(jnp.sum(xf * xf, axis=1))                   # (B,)
    w_target_norm = jnp.sqrt(jnp.sum(wt * wt, axis=0))            # (B,)

    cos_theta = logit_target / (w_target_norm * x_norm + 1e-10)
    sin2_theta = jnp.maximum(1.0 - cos_theta * cos_theta, 0.0)    # clamp fp round-off

    # cos(m*theta) via the binomial expansion (== calculate_cos_m_theta).
    cos_m_theta = jnp.zeros_like(cos_theta)
    for n in range(margin // 2 + 1):
        cos_m_theta = cos_m_theta + ((-1.0) ** n) * float(math.comb(margin, 2 * n)) * \
            (cos_theta ** (margin - 2 * n)) * (sin2_theta ** n)

    eps = 1e-7
    cos_cl = jnp.clip(cos_theta, -1.0 + eps, 1.0 - eps)
    k_fl = jnp.floor(jnp.arccos(cos_cl) / (math.pi / margin))     # find_k
    sign_k = 1.0 - 2.0 * jnp.mod(k_fl, 2.0)                       # (-1) ** k
    upd = w_target_norm * x_norm * (sign_k * cos_m_theta - 2.0 * k_fl)
    blended = (upd + beta * logit_target) / (1.0 + beta)          # (B,)

    # ---- tiled matmul + masked epilogue in Pallas ----
    tm = _pick_tm(B)
    Bp = _round_up(B, tm)
    Dp, Cp = wp.shape
    nk = Dp // tk
    gi, gj = Bp // tm, Cp // tn

    xp = _pad2(x, Bp, Dp).astype(mxu_dtype)
    tgt2d = jnp.full((Bp, 1), -1, jnp.int32).at[:B, 0].set(target.astype(jnp.int32))
    bl2d = jnp.zeros((Bp, 1), jnp.float32).at[:B, 0].set(blended)

    flops = 2 * Bp * Dp * Cp
    bytes_accessed = (xp.size * xp.dtype.itemsize * gj      # x re-read per C tile
                      + wp.size * wp.dtype.itemsize * gi    # w re-read per B tile
                      + Bp * Cp * 4)

    if nk == 1:
        out = pl.pallas_call(
            _lsx_train_kernel,
            out_shape=jax.ShapeDtypeStruct((Bp, Cp), jnp.float32),
            grid_spec=pltpu.PrefetchScalarGridSpec(
                num_scalar_prefetch=0,
                grid=(gi, gj),
                in_specs=[
                    pl.BlockSpec((tm, tk), lambda i, j: (i, 0)),
                    pl.BlockSpec((tk, tn), lambda i, j: (0, j)),
                    pl.BlockSpec((tm, 1), lambda i, j: (i, 0)),
                    pl.BlockSpec((tm, 1), lambda i, j: (i, 0)),
                ],
                out_specs=pl.BlockSpec((tm, tn), lambda i, j: (i, j)),
            ),
            compiler_params=pltpu.CompilerParams(
                dimension_semantics=("parallel", "parallel"),
                vmem_limit_bytes=_VMEM_LIMIT),
            cost_estimate=pl.CostEstimate(flops=flops, transcendentals=0,
                                          bytes_accessed=bytes_accessed),
        )(xp, wp, tgt2d, bl2d)
    else:
        out = pl.pallas_call(
            _lsx_train_kernel_acc,
            out_shape=jax.ShapeDtypeStruct((Bp, Cp), jnp.float32),
            grid_spec=pltpu.PrefetchScalarGridSpec(
                num_scalar_prefetch=0,
                grid=(gi, gj, nk),
                in_specs=[
                    pl.BlockSpec((tm, tk), lambda i, j, k: (i, k)),
                    pl.BlockSpec((tk, tn), lambda i, j, k: (k, j)),
                    pl.BlockSpec((tm, 1), lambda i, j, k: (i, 0)),
                    pl.BlockSpec((tm, 1), lambda i, j, k: (i, 0)),
                ],
                out_specs=pl.BlockSpec((tm, tn), lambda i, j, k: (i, j)),
                scratch_shapes=[pltpu.VMEM((tm, tn), jnp.float32)],
            ),
            compiler_params=pltpu.CompilerParams(
                dimension_semantics=("parallel", "parallel", "arbitrary"),
                vmem_limit_bytes=_VMEM_LIMIT),
            cost_estimate=pl.CostEstimate(flops=flops, transcendentals=0,
                                          bytes_accessed=bytes_accessed),
        )(xp, wp, tgt2d, bl2d)
    return out[:B, :C]


def lsoftmax_forward_eval(x, w, *, prepared=None, mxu_dtype=jnp.bfloat16, max_tk=2048):
    """Eval-mode LSoftmaxLinear forward: plain x @ w (tiled Pallas matmul)."""
    B, D = x.shape
    if prepared is None:
        prepared = prepare_weight(w, mxu_dtype=mxu_dtype, max_tk=max_tk)
    wp, (Dw, C, tk, tn) = prepared
    assert D == Dw

    tm = _pick_tm(B)
    Bp = _round_up(B, tm)
    Dp, Cp = wp.shape
    nk = Dp // tk
    gi, gj = Bp // tm, Cp // tn

    xp = _pad2(x, Bp, Dp).astype(mxu_dtype)
    flops = 2 * Bp * Dp * Cp
    bytes_accessed = (xp.size * xp.dtype.itemsize * gj
                      + wp.size * wp.dtype.itemsize * gi
                      + Bp * Cp * 4)

    if nk == 1:
        out = pl.pallas_call(
            _matmul_kernel,
            out_shape=jax.ShapeDtypeStruct((Bp, Cp), jnp.float32),
            grid_spec=pltpu.PrefetchScalarGridSpec(
                num_scalar_prefetch=0,
                grid=(gi, gj),
                in_specs=[
                    pl.BlockSpec((tm, tk), lambda i, j: (i, 0)),
                    pl.BlockSpec((tk, tn), lambda i, j: (0, j)),
                ],
                out_specs=pl.BlockSpec((tm, tn), lambda i, j: (i, j)),
            ),
            compiler_params=pltpu.CompilerParams(
                dimension_semantics=("parallel", "parallel"),
                vmem_limit_bytes=_VMEM_LIMIT),
            cost_estimate=pl.CostEstimate(flops=flops, transcendentals=0,
                                          bytes_accessed=bytes_accessed),
        )(xp, wp)
    else:
        out = pl.pallas_call(
            _matmul_kernel_acc,
            out_shape=jax.ShapeDtypeStruct((Bp, Cp), jnp.float32),
            grid_spec=pltpu.PrefetchScalarGridSpec(
                num_scalar_prefetch=0,
                grid=(gi, gj, nk),
                in_specs=[
                    pl.BlockSpec((tm, tk), lambda i, j, k: (i, k)),
                    pl.BlockSpec((tk, tn), lambda i, j, k: (k, j)),
                ],
                out_specs=pl.BlockSpec((tm, tn), lambda i, j, k: (i, j)),
                scratch_shapes=[pltpu.VMEM((tm, tn), jnp.float32)],
            ),
            compiler_params=pltpu.CompilerParams(
                dimension_semantics=("parallel", "parallel", "arbitrary"),
                vmem_limit_bytes=_VMEM_LIMIT),
            cost_estimate=pl.CostEstimate(flops=flops, transcendentals=0,
                                          bytes_accessed=bytes_accessed),
        )(xp, wp)
    return out[:B, :C]


# ---------------------------------------------------------------------------
# Pure-JAX reference (mirrors the PyTorch forward, training mode, f32 throughout)
# ---------------------------------------------------------------------------
def lsoftmax_train_ref(x, w, target, *, margin, it=0, beta_min=2.0, beta_max=300.0):
    beta = max(beta_min, beta_max / (1.0 + 0.01 * it))
    B = x.shape[0]
    logit = x @ w
    rows = jnp.arange(B)
    logit_target = logit[rows, target]
    w_target_norm = jnp.linalg.norm(w[:, target], axis=0)
    x_norm = jnp.linalg.norm(x, axis=1)
    cos_theta = logit_target / (w_target_norm * x_norm + 1e-10)
    sin2_theta = 1.0 - cos_theta ** 2

    cos_m_theta = jnp.zeros_like(cos_theta)
    for n in range(margin // 2 + 1):
        cos_m_theta = cos_m_theta + ((-1.0) ** n) * math.comb(margin, 2 * n) * \
            (cos_theta ** (margin - 2 * n)) * (sin2_theta ** n)

    eps = 1e-7
    cos_cl = jnp.clip(cos_theta, -1.0 + eps, 1.0 - eps)
    k = jnp.floor(jnp.arccos(cos_cl) / (math.pi / margin))
    sign_k = 1.0 - 2.0 * jnp.mod(k, 2.0)
    upd = w_target_norm * x_norm * (sign_k * cos_m_theta - 2.0 * k)
    blended = (upd + beta * logit_target) / (1.0 + beta)
    return logit.at[rows, target].set(blended)


# ---------------------------------------------------------------------------
# Main
# ---------------------------------------------------------------------------
if __name__ == "__main__":
    # Tolerances allow for bf16 MXU operand quantization (f32 accumulation);
    # pass mxu_dtype=jnp.float32 if exact-f32 semantics are required.
    RTOL, ATOL = 2e-2, 3e-2

    # Case 1: small shapes matching the module spec; collapsed-k, single-tile grid.
    B, D, C, MARGIN = 8, 32, 16, 4
    key = jax.random.PRNGKey(0)
    kx, kw, kt = jax.random.split(key, 3)
    x = jax.random.normal(kx, (B, D), dtype=jnp.float32)
    # kaiming_normal_ on weight.t() (shape (C, D), fan_in = D): std = sqrt(2/D)
    w = jax.random.normal(kw, (D, C), dtype=jnp.float32) * math.sqrt(2.0 / D)
    target = jax.random.randint(kt, (B,), 0, C, dtype=jnp.int32)

    prep = prepare_weight(w)   # pad + bf16-cast the weight once ("at init")
    out_train = jax.block_until_ready(
        lsoftmax_forward_train(x, w, target, margin=MARGIN, it=0, prepared=prep))
    out_eval = jax.block_until_ready(lsoftmax_forward_eval(x, w, prepared=prep))

    ref_train = lsoftmax_train_ref(x, w, target, margin=MARGIN, it=0)
    ref_eval = x @ w
    np.testing.assert_allclose(np.asarray(out_train), np.asarray(ref_train),
                               rtol=RTOL, atol=ATOL)
    np.testing.assert_allclose(np.asarray(out_eval), np.asarray(ref_eval),
                               rtol=RTOL, atol=ATOL)

    # Case 2: multi-tile C (column-offset path) + k-tiled accumulator path
    # (max_tk=256 forces D=640 onto the accumulator kernel with 3 k-steps).
    B2, D2, C2, M2 = 40, 640, 272, 3
    k2 = jax.random.PRNGKey(1)
    kx2, kw2, kt2 = jax.random.split(k2, 3)
    x2 = jax.random.normal(kx2, (B2, D2), dtype=jnp.float32)
    w2 = jax.random.normal(kw2, (D2, C2), dtype=jnp.float32) * math.sqrt(2.0 / D2)
    t2 = jax.random.randint(kt2, (B2,), 0, C2, dtype=jnp.int32)

    out2 = jax.block_until_ready(
        lsoftmax_forward_train(x2, w2, t2, margin=M2, it=5, max_tk=256))
    ref2 = lsoftmax_train_ref(x2, w2, t2, margin=M2, it=5)
    np.testing.assert_allclose(np.asarray(out2), np.asarray(ref2),
                               rtol=RTOL, atol=ATOL)

    # TODO(synk): the PyTorch module's mutable `self.it` counter and logger.info are
    # host-side state; they are exposed here as the explicit `it` argument instead.
    print("KERNEL_OK")
</pallas_src>

<mosaic_0001>
module attributes {stable_mosaic.version = 11 : i64} {
  func.func @_lsx_train_kernel(%arg0: i32, %arg1: i32, %arg2: memref<16x128xbf16, #tpu.memory_space<vmem>>, %arg3: memref<128x128xbf16, #tpu.memory_space<vmem>>, %arg4: memref<16x1xi32, #tpu.memory_space<vmem>>, %arg5: memref<16x1xf32, #tpu.memory_space<vmem>>, %arg6: memref<16x128xf32, #tpu.memory_space<vmem>>) attributes {dimension_semantics = [#tpu.dimension_semantics<parallel>, #tpu.dimension_semantics<parallel>], iteration_bounds = array<i64: 1, 1>, scalar_prefetch = 0 : i64, scratch_operands = 0 : i64, tpu.core_type = #tpu.core_type<tc>, window_params = [{transform_indices = @transform_0, window_bounds = array<i64: 16, 128>}, {transform_indices = @transform_1, window_bounds = array<i64: 128, 128>}, {transform_indices = @transform_2, window_bounds = array<i64: 16, 1>}, {transform_indices = @transform_3, window_bounds = array<i64: 16, 1>}, {transform_indices = @transform_4, window_bounds = array<i64: 16, 128>}]} {
    %c0 = arith.constant 0 : index
    %c0_0 = arith.constant 0 : index
    %0 = vector.load %arg2[%c0, %c0_0] : memref<16x128xbf16, #tpu.memory_space<vmem>>, vector<16x128xbf16>
    %c0_1 = arith.constant 0 : index
    %c0_2 = arith.constant 0 : index
    %1 = vector.load %arg3[%c0_1, %c0_2] : memref<128x128xbf16, #tpu.memory_space<vmem>>, vector<128x128xbf16>
    %cst = arith.constant dense<0.000000e+00> : vector<16x128xf32>
    %2 = tpu.matmul %0, %1, %cst {dimension_numbers = #tpu.dot_dimension_numbers<[1], [0], [0], [1], [0, 0, 1, 1], [], []>} : vector<16x128xbf16>, vector<128x128xbf16>, vector<16x128xf32> -> vector<16x128xf32>
    %3 = tpu.iota {dimensions = array<i32: 1>} : vector<16x128xi32>
    %c128_i32 = arith.constant 128 : i32
    %4 = arith.muli %arg1, %c128_i32 : i32
    %5 = vector.broadcast %4 : i32 to vector<16x128xi32>
    %6 = arith.addi %3, %5 : vector<16x128xi32>
    %c0_3 = arith.constant 0 : index
    %c0_4 = arith.constant 0 : index
    %7 = vector.load %arg4[%c0_3, %c0_4] : memref<16x1xi32, #tpu.memory_space<vmem>>, vector<16x1xi32>
    %8 = vector.broadcast %7 : vector<16x1xi32> to vector<16x128xi32>
    %9 = arith.cmpi eq, %6, %8 : vector<16x128xi32>
    %c0_5 = arith.constant 0 : index
    %c0_6 = arith.constant 0 : index
    %10 = vector.load %arg5[%c0_5, %c0_6] : memref<16x1xf32, #tpu.memory_space<vmem>>, vector<16x1xf32>
    %11 = vector.shape_cast %10 : vector<16x1xf32> to vector<16x1xf32>
    %12 = vector.broadcast %11 : vector<16x1xf32> to vector<16x128xf32>
    %13 = arith.select %9, %12, %2 : vector<16x128xi1>, vector<16x128xf32>
    %c0_7 = arith.constant 0 : index
    %c0_8 = arith.constant 0 : index
    %14 = vector.load %arg6[%c0_7, %c0_8] : memref<16x128xf32, #tpu.memory_space<vmem>>, vector<16x128xf32>
    tpu.vector_store %arg6[%c0_7, %c0_8], %13 {strides = array<i32>} : memref<16x128xf32, #tpu.memory_space<vmem>>, vector<16x128xf32>,
    return
  }
  func.func @transform_0(%arg0: i32, %arg1: i32) -> (i32, i32) {
    %c0_i32 = arith.constant 0 : i32
    %c0_i32_0 = arith.constant 0 : i32
    return %arg0, %c0_i32 : i32, i32
  }
  func.func @transform_1(%arg0: i32, %arg1: i32) -> (i32, i32) {
    %c0_i32 = arith.constant 0 : i32
    %c0_i32_0 = arith.constant 0 : i32
    return %c0_i32, %arg1 : i32, i32
  }
  func.func @transform_2(%arg0: i32, %arg1: i32) -> (i32, i32) {
    %c0_i32 = arith.constant 0 : i32
    %c0_i32_0 = arith.constant 0 : i32
    return %arg0, %c0_i32 : i32, i32
  }
  func.func @transform_3(%arg0: i32, %arg1: i32) -> (i32, i32) {
    %c0_i32 = arith.constant 0 : i32
    %c0_i32_0 = arith.constant 0 : i32
    return %arg0, %c0_i32 : i32, i32
  }
  func.func @transform_4(%arg0: i32, %arg1: i32) -> (i32, i32) {
    %c0_i32 = arith.constant 0 : i32
    return %arg0, %arg1 : i32, i32
  }
}

</mosaic_0001>

<llo_original>
// kernel: tpu_custom_call.1
$region0: #{tpu_custom_call.1}
  #allocation0 [shape = 'u32[]', space=smem, size = 0x4, offset = 0x4, fixed_abs, tag = 'smem constant byte address 0x4 - core index']
  #allocation1 [shape = 'u32[144,128]{1,0:T(1,128)}', space=vmem, size = 0x12000, scoped, tag = 'internal scratch']
  %s0 = inlined_call_operand.vmem [shape: bf16[16,128], index: 0, kind: input, shape index: {}]
  %s1 = inlined_call_operand.hbm [shape: bf16[128,128], index: 1, kind: input, shape index: {}]
  %s2 = inlined_call_operand.vmem [shape: s32[16,1], index: 2, kind: input, shape index: {}]
  %s3 = inlined_call_operand.vmem [shape: f32[16,1], index: 3, kind: input, shape index: {}]
  %s4 = inlined_call_operand.hbm [shape: f32[16,128], index: 4, kind: output, shape index: {}]
  %s5 = sld [smem:[#allocation0]]
  $region30: #{tpu_custom_call.1} parent=0
    _
  %s7 = ssub.s32 1, %s5
  %s8 = scalar_select 0, %s7, %s5
  $region1: #{tpu_custom_call.1} parent=0
    #allocation2 [shape = 'u8[32768]{0}', space=vmem, size = 0x8000, scoped, tag = 'input window, operand 1, single buffered']
    #allocation3 [shape = 's32[1]{0}', space=sflag, size = 0x4, scoped, tag = 'scoped memory for tpu_custom_call.1']
    #allocation4 [shape = 's32[1]{0}', space=sflag, size = 0x4, scoped, tag = 'scoped memory for tpu_custom_call.1']
    #allocation5 [shape = 'u8[8192]{0}', space=vmem, size = 0x2000, scoped, tag = 'output window, operand 0, single buffered']
    %9 = vsyncpa [#allocation3], 0
    %10 = vsyncpa [#allocation4], 0
    // Predicated region
    $region2: #{tpu_custom_call.1} parent=1 // pred_check
      _
    $region3: #{tpu_custom_call.1} parent=1 // pred_check_branch
      %12 = sbr.rel (0) target = $region5
    $region4: #{tpu_custom_call.1} parent=1 // pred_region
      _
    $region5: #{tpu_custom_call.1} parent=1 // pred_fallthru
      _
    // Predicated region
    $region6: #{tpu_custom_call.1} parent=1 // pred_check
      _
    $region7: #{tpu_custom_call.1} parent=1 // pred_check_branch
      %14 = sbr.rel (0) target = $region9
    $region8: #{tpu_custom_call.1} parent=1 // pred_region
      %s16 = ssub.s32 1024, 1024
      %17 = vsyncadd [#allocation3], %s16
      %s18 = sshll.u32 [#allocation2], 4
      %s19 = int_to_ptr.vmem [resolvable:$true] %s18
      %24 = dma.hbm_to_vmem [thread:$0]  %s1, 1024, %s19, [#allocation3], 64, 64, 4
    $region9: #{tpu_custom_call.1} parent=1 // pred_fallthru
      _
    // Predicated region
    $region10: #{tpu_custom_call.1} parent=1 // pred_check
      _
    $region11: #{tpu_custom_call.1} parent=1 // pred_check_branch
      %26 = sbr.rel (0) target = $region13
    $region12: #{tpu_custom_call.1} parent=1 // pred_region
      _
    $region13: #{tpu_custom_call.1} parent=1 // pred_fallthru
      _
    // Predicated region
    $region14: #{tpu_custom_call.1} parent=1 // pred_check
      _
    $region15: #{tpu_custom_call.1} parent=1 // pred_check_branch
      %28 = sbr.rel (0) target = $region17
    $region16: #{tpu_custom_call.1} parent=1 // pred_region
      _
    $region17: #{tpu_custom_call.1} parent=1 // pred_fallthru
      _
    // Predicated region
    $region18: #{tpu_custom_call.1} parent=1 // pred_check
      _
    $region19: #{tpu_custom_call.1} parent=1 // pred_check_branch
      %30 = sbr.rel (0) target = $region21
    $region20: #{tpu_custom_call.1} parent=1 // pred_region
      %31 = dma.done [#allocation3], 1024
    $region21: #{tpu_custom_call.1} parent=1 // pred_fallthru
      _
    %v33 = vld [vmem:[%s0] sm:$0xf]
    %v34 = vld [vmem:[%s0 + $0x4] sm:$0xf]
    %v35 = vld [vmem:[#allocation2] sm:$0xf]
    %v36 = vld [vmem:[#allocation2 + $0x4] sm:$0xf]
    %v37 = vld [vmem:[#allocation2 + $0x8] sm:$0xf]
    %v38 = vld [vmem:[#allocation2 + $0xc] sm:$0xf]
    %v39 = vld [vmem:[#allocation2 + $0x10] sm:$0xf]
    %v40 = vld [vmem:[#allocation2 + $0x14] sm:$0xf]
    %v41 = vld [vmem:[#allocation2 + $0x18] sm:$0xf]
    %v42 = vld [vmem:[#allocation2 + $0x1c] sm:$0xf]
    %v43 = vld [vmem:[#allocation2 + $0x20] sm:$0xf]
    %v44 = vld [vmem:[#allocation2 + $0x24] sm:$0xf]
    %v45 = vld [vmem:[#allocation2 + $0x28] sm:$0xf]
    %v46 = vld [vmem:[#allocation2 + $0x2c] sm:$0xf]
    %v47 = vld [vmem:[#allocation2 + $0x30] sm:$0xf]
    %v48 = vld [vmem:[#allocation2 + $0x34] sm:$0xf]
    %v49 = vld [vmem:[#allocation2 + $0x38] sm:$0xf]
    %v50 = vld [vmem:[#allocation2 + $0x3c] sm:$0xf]
    %v53 = vunpack.c.l.b16 %v33
    %v54 = vunpack.c.l.b16 %v34
    %v55 = vpack.c.b16 %v54, %v53
    %v73 = vunpack.c.l.b16 %v35
    %v74 = vunpack.c.l.b16 %v36
    %v75 = vunpack.c.l.b16 %v37
    %v76 = vunpack.c.l.b16 %v38
    %v77 = vunpack.c.l.b16 %v39
    %v78 = vunpack.c.l.b16 %v40
    %v79 = vunpack.c.l.b16 %v41
    %v80 = vunpack.c.l.b16 %v42
    %v81 = vunpack.c.l.b16 %v43
    %v82 = vunpack.c.l.b16 %v44
    %v83 = vunpack.c.l.b16 %v45
    %v84 = vunpack.c.l.b16 %v46
    %v85 = vunpack.c.l.b16 %v47
    %v86 = vunpack.c.l.b16 %v48
    %v87 = vunpack.c.l.b16 %v49
    %v88 = vunpack.c.l.b16 %v50
    %v89 = vpack.c.b16 %v74, %v73
    %v90 = vpack.c.b16 %v76, %v75
    %v91 = vpack.c.b16 %v78, %v77
    %v92 = vpack.c.b16 %v80, %v79
    %v93 = vpack.c.b16 %v82, %v81
    %v94 = vpack.c.b16 %v84, %v83
    %v95 = vpack.c.b16 %v86, %v85
    %v96 = vpack.c.b16 %v88, %v87
    %105 = vmatprep.subr.bf16.mxu0 0
    %106 = vmatpush1.bf16.msra.mxu0 %v96
    %107 = vmatprep.subr.bf16.mxu0 0
    %108 = vmatpush1.bf16.msra.mxu0 %v95
    %109 = vmatprep.subr.bf16.mxu0 0
    %110 = vmatpush1.bf16.msra.mxu0 %v94
    %111 = vmatprep.subr.bf16.mxu0 0
    %112 = vmatpush1.bf16.msra.mxu0 %v93
    %113 = vmatprep.subr.bf16.mxu0 0
    %114 = vmatpush1.bf16.msra.mxu0 %v92
    %115 = vmatprep.subr.bf16.mxu0 0
    %116 = vmatpush1.bf16.msra.mxu0 %v91
    %117 = vmatprep.subr.bf16.mxu0 0
    %118 = vmatpush1.bf16.msra.mxu0 %v90
    %119 = vmatprep.subr.bf16.mxu0 0
    %120 = vmatpush1.bf16.msra.mxu0 %v89
    %121 = vmatprep.subr.bf16.mxu0 0
    %122 = vmatpush2.bf16.msra.mxu0 0
    %123 = vmatprep.subr.bf16.mxu0 0
    %124 = vmatpush2.bf16.msra.mxu0 0
    %125 = vmatprep.subr.bf16.mxu0 0
    %126 = vmatpush2.bf16.msra.mxu0 0
    %127 = vmatprep.subr.bf16.mxu0 0
    %128 = vmatpush2.bf16.msra.mxu0 0
    %129 = vmatprep.subr.bf16.mxu0 0
    %130 = vmatpush2.bf16.msra.mxu0 0
    %131 = vmatprep.subr.bf16.mxu0 0
    %132 = vmatpush2.bf16.msra.mxu0 0
    %133 = vmatprep.subr.bf16.mxu0 0
    %134 = vmatpush2.bf16.msra.mxu0 0
    %135 = vmatprep.subr.bf16.mxu0 0
    %136 = vmatpush2.bf16.msra.mxu0 0
    %137 = vmatprep.mubr.bf16.mxu0 0
    %138 = vmatmul.mubr.bf16.gmra.mxu0 %v55
    %v139 = vpop.f32.mrf.mxu0
    %v140 = vadd.f32 0.0, %v139
    %v141 = vpop.f32.mrf.mxu0
    %v142 = vpop.f32.mrf.mxu0
    %v143 = vadd.f32 0.0, %v142
    %v144 = vpop.f32.mrf.mxu0
    %145 = vdwg.mxu0
    %v146 = vlaneseq
    %v147 = vand.u32 %v146, 127
    %s148 = smul.u32 0, 128
    %v149 = vstv %s148
    %v150 = vadd.s32 %v147, %v149
    %v151 = vld [vmem:[%s2] sm:$0xff]
    %v152 = vld [vmem:[%s2 + $0x8] sm:$0xff]
    %153 = vset.pattern.permute.xlu0 0
    %154 = vperm.xlu0 %153, %v151
    %v155 = vpop.permute.xlu0 %154
    %156 = vset.pattern.permute.xlu0 0
    %157 = vperm.xlu0 %156, %v152
    %v158 = vpop.permute.xlu0 %157
    %vm159 = vcmp.eq.s32.totalorder %v150, %v155
    %vm160 = vcmp.eq.s32.totalorder %v150, %v158
    %v161 = vld [vmem:[%s3] sm:$0xff]
    %v162 = vld [vmem:[%s3 + $0x8] sm:$0xff]
    %164 = vset.pattern.permute.xlu0 0
    %165 = vperm.xlu0 %164, %v161
    %v166 = vpop.permute.xlu0 %165
    %169 = vset.pattern.permute.xlu0 0
    %170 = vperm.xlu0 %169, %v162
    %v171 = vpop.permute.xlu0 %170
    %v173 = vsel %vm159, %v166, %v140
    %v174 = vsel %vm160, %v171, %v143
    %175 = vst [vmem:[#allocation5] sm:$0xff] %v173
    %176 = vst [vmem:[#allocation5 + $0x8] sm:$0xff] %v174
    // Predicated region
    $region22: #{tpu_custom_call.1} parent=1 // pred_check
      _
    $region23: #{tpu_custom_call.1} parent=1 // pred_check_branch
      %178 = sbr.rel (0) target = $region25
    $region24: #{tpu_custom_call.1} parent=1 // pred_region
      %s180 = ssub.s32 256, 256
      %181 = vsyncadd [#allocation4], %s180
      %s182 = sshll.u32 [#allocation5], 4
      %s183 = int_to_ptr.vmem [resolvable:$true] %s182
      %188 = dma.vmem_to_hbm [thread:$0]  %s183, 256, %s4, [#allocation4], 128, 128, 8
    $region25: #{tpu_custom_call.1} parent=1 // pred_fallthru
      _
    // Predicated region
    $region26: #{tpu_custom_call.1} parent=1 // pred_check
      _
    $region27: #{tpu_custom_call.1} parent=1 // pred_check_branch
      %190 = sbr.rel (0) target = $region29
    $region28: #{tpu_custom_call.1} parent=1 // pred_region
      %191 = dma.done [#allocation4], 256
    $region29: #{tpu_custom_call.1} parent=1 // pred_fallthru
      _
    %192 = vsyncpa [#allocation3], 1
    %193 = vsyncpa [#allocation4], 1

</llo_original>
